<compile_context>
chip_gen: v7x
topology: tpu7x:2x2x1
jax: 0.10.0
libtpu: 0.0.40
codegen_flags: <defaults>
</compile_context>

<pallas_src>
import functools
import math

import jax
import jax.numpy as jnp
from jax.experimental import pallas as pl
from jax.experimental.pallas import tpu as pltpu


# ---------------------------------------------------------------------------
# Pallas kernel: fused GNN -> concat -> fc1+relu -> GRUCell -> fc2
# ---------------------------------------------------------------------------
def actor_gnn_kernel(
    x_ref,      # (R, D)      raw agent inputs (row block, f32)
    h_ref,      # (R, H)      previous hidden state (row block, f32)
    wg_ref,     # (2D, Hg)    [W_self ; W_msg]            (bf16, resident)
    w1_ref,     # (Hg+D, H)   [W1_gnn ; W1_raw]           (bf16, resident)
    wgru_ref,   # (2H, 4H)    [Wr | Wz | [Win;0] | [0;Whn]] (bf16, resident)
    w2_ref,     # (H, 128)    fc2 weight zero-padded to 128 lanes (bf16, resident)
    b_ref,      # (8, NB)     bias slab (f32): row0=gru(4H), row1=bg, row2=b1, row3=b2
    q_ref,      # (R, 128)    output: action values (bf16, lane-dense padded)
    hout_ref,   # (R, H)      output: new hidden state (f32, aliased with h input)
    agg_ref,    # (R, D)      VMEM scratch for the episode-mean broadcast
    *,
    n_agents,
    ep_block,
):
    f32 = jnp.float32
    bf16 = jnp.bfloat16

    x = x_ref[...]                                   # (R, D) f32
    h = h_ref[...]                                   # (R, H) f32
    H = h.shape[-1]
    Hg = wg_ref.shape[-1]

    b = b_ref[...]
    b_gru = b[0:1, : 4 * H]                          # (1, 4H)
    bg = b[1:2, :Hg]
    b1 = b[2:3, :H]
    b2 = b[3:4, : q_ref.shape[-1]]

    # ---- episode mean (SharedGNN stand-in aggregation): strided sublane reads ----
    ep_sum = x_ref[pl.ds(0, ep_block, stride=n_agents), :]
    for a in range(1, n_agents):
        ep_sum = ep_sum + x_ref[pl.ds(a, ep_block, stride=n_agents), :]
    ep_mean = ep_sum * (1.0 / n_agents)              # (E, D)
    # broadcast back to every agent row via strided sublane scatter into scratch
    for a in range(n_agents):
        agg_ref[pl.ds(a, ep_block, stride=n_agents), :] = ep_mean

    # ---- GNN layer: relu([x | agg] @ [W_self ; W_msg] + bg), one fused matmul ----
    x16 = x.astype(bf16)
    xa = jnp.concatenate([x16, agg_ref[...].astype(bf16)], axis=-1)        # (R, 2D)
    g = jnp.maximum(
        jnp.dot(xa, wg_ref[...], preferred_element_type=f32) + bg, 0.0)

    # ---- fc1 over concat([gnn_out, inputs], -1): one fused matmul ----
    gx = jnp.concatenate([g.astype(bf16), x16], axis=-1)                   # (R, Hg+D)
    y = jnp.maximum(
        jnp.dot(gx, w1_ref[...], preferred_element_type=f32) + b1, 0.0)

    # ---- GRUCell (torch gate order r, z, n): one fused K=2H, N=4H matmul ----
    yh = jnp.concatenate([y.astype(bf16), h.astype(bf16)], axis=-1)        # (R, 2H)
    gates = jnp.dot(yh, wgru_ref[...], preferred_element_type=f32) + b_gru  # (R, 4H)
    r = jax.nn.sigmoid(gates[:, 0 * H:1 * H])
    z = jax.nn.sigmoid(gates[:, 1 * H:2 * H])
    n = jnp.tanh(gates[:, 2 * H:3 * H] + r * gates[:, 3 * H:4 * H])
    h_new = (1.0 - z) * n + z * h
    hout_ref[...] = h_new

    # ---- fc2: lane-dense 128-wide padded bf16 writeback ----
    q = jnp.dot(h_new.astype(bf16), w2_ref[...], preferred_element_type=f32) + b2
    q_ref[...] = q.astype(q_ref.dtype)


# ---------------------------------------------------------------------------
# Wrapper
# ---------------------------------------------------------------------------
def _rows_per_block(B, n_agents, max_rows):
    """Largest row-block that is a multiple of lcm(8, n_agents), divides B, is
    <= max_rows, and (when possible) leaves >= 2 blocks so both v7x TensorCores
    get work."""
    base = (8 * n_agents) // math.gcd(8, n_agents)
    if B % base != 0:
        # TODO(synk): add tail masking for ragged B; a single full block is always legal.
        return B
    cap = min(max_rows, B)
    if B >= 2 * base:
        cap = min(cap, B // 2)            # guarantee at least two grid blocks
    best = base
    r = base
    while r <= cap:
        if B % r == 0:
            best = r
        r += base
    return best


@functools.partial(jax.jit, static_argnames=("batch", "n_agents", "max_rows_per_block"))
def actor_gnn_forward(inputs, hidden, params, *, batch, n_agents, max_rows_per_block=1024):
    f32, bf16 = jnp.float32, jnp.bfloat16
    B, D = inputs.shape
    H = hidden.shape[-1]
    Hg = params["wg_self"].shape[-1]
    A = params["w2"].shape[-1]
    NA_PAD = 128
    NB = max(128, 4 * H)
    assert B == batch * n_agents
    assert A <= NA_PAD and Hg <= NB and 4 * H <= NB

    rows_pb = _rows_per_block(B, n_agents, max_rows_per_block)
    num_blocks = B // rows_pb
    ep_block = rows_pb // n_agents

    # ---- pack weights (bf16 matmul operands; f32 accumulation in-kernel) ----
    w_ih, w_hh = params["w_ih"], params["w_hh"]          # (H, 3H), gate order r|z|n
    b_ih, b_hh = params["b_ih"], params["b_hh"]          # (1, 3H)
    zH = jnp.zeros((H, H), f32)
    w_gru = jnp.concatenate([
        jnp.concatenate([w_ih[:, 0 * H:1 * H], w_hh[:, 0 * H:1 * H]], axis=0),  # r
        jnp.concatenate([w_ih[:, 1 * H:2 * H], w_hh[:, 1 * H:2 * H]], axis=0),  # z
        jnp.concatenate([w_ih[:, 2 * H:3 * H], zH], axis=0),                    # n, input part
        jnp.concatenate([zH, w_hh[:, 2 * H:3 * H]], axis=0),                    # n, hidden part
    ], axis=-1).astype(bf16)                                                    # (2H, 4H)

    w_gnn = jnp.concatenate([params["wg_self"], params["wg_msg"]], axis=0).astype(bf16)  # (2D, Hg)
    w_1 = jnp.concatenate([params["w1_g"], params["w1_x"]], axis=0).astype(bf16)         # (Hg+D, H)
    w2p = jnp.zeros((H, NA_PAD), f32).at[:, :A].set(params["w2"]).astype(bf16)           # (H, 128)

    b_all = jnp.zeros((8, NB), f32)
    b_all = b_all.at[0, 0 * H:1 * H].set(b_ih[0, 0 * H:1 * H] + b_hh[0, 0 * H:1 * H])
    b_all = b_all.at[0, 1 * H:2 * H].set(b_ih[0, 1 * H:2 * H] + b_hh[0, 1 * H:2 * H])
    b_all = b_all.at[0, 2 * H:3 * H].set(b_ih[0, 2 * H:3 * H])
    b_all = b_all.at[0, 3 * H:4 * H].set(b_hh[0, 2 * H:3 * H])
    b_all = b_all.at[1, :Hg].set(params["bg"][0])
    b_all = b_all.at[2, :H].set(params["b1"][0])
    b_all = b_all.at[3, :A].set(params["b2"][0])

    kernel = functools.partial(actor_gnn_kernel, n_agents=n_agents, ep_block=ep_block)

    mac = 2 * D * Hg + (Hg + D) * H + 2 * H * 4 * H + H * NA_PAD
    cost = pl.CostEstimate(
        flops=2 * B * mac,
        transcendentals=3 * B * H,
        bytes_accessed=B * (D * 4 + H * 4 + NA_PAD * 2 + H * 4) + 2 * mac + 8 * NB * 4,
    )

    q_pad, h_out = pl.pallas_call(
        kernel,
        out_shape=(
            jax.ShapeDtypeStruct((B, NA_PAD), bf16),
            jax.ShapeDtypeStruct((B, H), f32),
        ),
        grid=(num_blocks,),
        in_specs=[
            pl.BlockSpec((rows_pb, D), lambda i: (i, 0)),       # x      (row block)
            pl.BlockSpec((rows_pb, H), lambda i: (i, 0)),       # h      (row block)
            pl.BlockSpec((2 * D, Hg), lambda i: (0, 0)),        # w_gnn  (resident)
            pl.BlockSpec((Hg + D, H), lambda i: (0, 0)),        # w_fc1  (resident)
            pl.BlockSpec((2 * H, 4 * H), lambda i: (0, 0)),     # w_gru  (resident)
            pl.BlockSpec((H, NA_PAD), lambda i: (0, 0)),        # w_fc2  (resident)
            pl.BlockSpec((8, NB), lambda i: (0, 0)),            # bias slab
        ],
        out_specs=(
            pl.BlockSpec((rows_pb, NA_PAD), lambda i: (i, 0)),
            pl.BlockSpec((rows_pb, H), lambda i: (i, 0)),
        ),
        scratch_shapes=[pltpu.VMEM((rows_pb, D), f32)],         # episode-mean broadcast
        input_output_aliases={1: 1},                            # hidden updated in place
        compiler_params=pltpu.CompilerParams(dimension_semantics=("parallel",)),
        cost_estimate=cost,
    )(inputs, hidden, w_gnn, w_1, w_gru, w2p, b_all)

    return q_pad[:, :A], h_out


# ---------------------------------------------------------------------------
# Pure-JAX reference (mirrors the PyTorch forward) for a correctness check
# ---------------------------------------------------------------------------
def reference_forward(x, h, p, batch, n_agents):
    B, D = x.shape
    xg = x.reshape(batch, n_agents, D)
    agg = jnp.broadcast_to(xg.mean(axis=1, keepdims=True), xg.shape).reshape(B, D)
    g = jax.nn.relu(x @ p["wg_self"] + agg @ p["wg_msg"] + p["bg"])
    cat = jnp.concatenate([g, x], axis=-1)
    w1 = jnp.concatenate([p["w1_g"], p["w1_x"]], axis=0)
    y = jax.nn.relu(cat @ w1 + p["b1"])
    H = h.shape[-1]
    gi = y @ p["w_ih"] + p["b_ih"]
    gh = h @ p["w_hh"] + p["b_hh"]
    r = jax.nn.sigmoid(gi[:, :H] + gh[:, :H])
    z = jax.nn.sigmoid(gi[:, H:2 * H] + gh[:, H:2 * H])
    n = jnp.tanh(gi[:, 2 * H:] + r * gh[:, 2 * H:])
    h_new = (1.0 - z) * n + z * h
    q = h_new @ p["w2"] + p["b2"]
    return q, h_new


# ---------------------------------------------------------------------------
# Main
# ---------------------------------------------------------------------------
if __name__ == "__main__":
    batch = 8
    n_agents = 4
    B = batch * n_agents          # flattened agent-batch rows
    D = 24                        # raw per-agent input_shape
    Hg = 32                       # args.hidden_dim_gnn
    H = 64                        # args.hidden_dim
    A = 10                        # args.n_actions

    key = jax.random.PRNGKey(0)
    ks = jax.random.split(key, 16)

    def u(k, shape, fan_in):
        bound = 1.0 / jnp.sqrt(jnp.float32(fan_in))
        return jax.random.uniform(k, shape, jnp.float32, -bound, bound)

    params = {
        # GNN stand-in
        "wg_self": u(ks[0], (D, Hg), D),
        "wg_msg":  u(ks[1], (D, Hg), D),
        "bg":      u(ks[2], (1, Hg), D),
        # fc1 (weight split along the concat axis: [gnn_feats ; raw_inputs])
        "w1_g":    u(ks[3], (Hg, H), Hg + D),
        "w1_x":    u(ks[4], (D, H), Hg + D),
        "b1":      u(ks[5], (1, H), Hg + D),
        # GRUCell (gate order r|z|n, like torch.nn.GRUCell), stored (in, out)
        "w_ih":    u(ks[6], (H, 3 * H), H),
        "b_ih":    u(ks[7], (1, 3 * H), H),
        "w_hh":    u(ks[8], (H, 3 * H), H),
        "b_hh":    u(ks[9], (1, 3 * H), H),
        # fc2
        "w2":      u(ks[10], (H, A), H),
        "b2":      u(ks[11], (1, A), H),
    }

    inputs = jax.random.normal(ks[12], (B, D), jnp.float32)
    hidden = jax.random.normal(ks[13], (B, H), jnp.float32)

    # max_rows_per_block=16 -> two row blocks, exercising the 'parallel' grid.
    q, h_out = actor_gnn_forward(
        inputs, hidden, params, batch=batch, n_agents=n_agents, max_rows_per_block=16
    )
    jax.block_until_ready((q, h_out))

    q_ref, h_ref = reference_forward(inputs, hidden, params, batch, n_agents)
    # bf16 matmul operands + bf16 q writeback -> compare with loose tolerances.
    assert jnp.allclose(q.astype(jnp.float32), q_ref, atol=5e-2, rtol=5e-2)
    assert jnp.allclose(h_out, h_ref, atol=5e-2, rtol=5e-2)

    print("KERNEL_OK")
</pallas_src>

<mosaic_0001>
module attributes {stable_mosaic.version = 11 : i64} {
  func.func @actor_gnn_kernel(%arg0: i32, %arg1: memref<16x24xf32, #tpu.memory_space<vmem>>, %arg2: memref<16x64xf32, #tpu.memory_space<vmem>>, %arg3: memref<48x32xbf16, #tpu.memory_space<vmem>>, %arg4: memref<56x64xbf16, #tpu.memory_space<vmem>>, %arg5: memref<128x256xbf16, #tpu.memory_space<vmem>>, %arg6: memref<64x128xbf16, #tpu.memory_space<vmem>>, %arg7: memref<8x256xf32, #tpu.memory_space<vmem>>, %arg8: memref<16x128xbf16, #tpu.memory_space<vmem>>, %arg9: memref<16x64xf32, #tpu.memory_space<vmem>>, %arg10: memref<16x24xf32, #tpu.memory_space<vmem>>) attributes {dimension_semantics = [#tpu.dimension_semantics<parallel>], iteration_bounds = array<i64: 2>, scalar_prefetch = 0 : i64, scratch_operands = 1 : i64, tpu.core_type = #tpu.core_type<tc>, window_params = [{transform_indices = @transform_0, window_bounds = array<i64: 16, 24>}, {transform_indices = @transform_1, window_bounds = array<i64: 16, 64>}, {pipeline_mode = #tpu.pipeline_mode<synchronous>, transform_indices = @transform_2, window_bounds = array<i64: 48, 32>}, {pipeline_mode = #tpu.pipeline_mode<synchronous>, transform_indices = @transform_3, window_bounds = array<i64: 56, 64>}, {pipeline_mode = #tpu.pipeline_mode<synchronous>, transform_indices = @transform_4, window_bounds = array<i64: 128, 256>}, {pipeline_mode = #tpu.pipeline_mode<synchronous>, transform_indices = @transform_5, window_bounds = array<i64: 64, 128>}, {pipeline_mode = #tpu.pipeline_mode<synchronous>, transform_indices = @transform_6, window_bounds = array<i64: 8, 256>}, {transform_indices = @transform_7, window_bounds = array<i64: 16, 128>}, {transform_indices = @transform_8, window_bounds = array<i64: 16, 64>}]} {
    %c0 = arith.constant 0 : index
    %c0_0 = arith.constant 0 : index
    %0 = vector.load %arg1[%c0, %c0_0] : memref<16x24xf32, #tpu.memory_space<vmem>>, vector<16x24xf32>
    %c0_1 = arith.constant 0 : index
    %c0_2 = arith.constant 0 : index
    %1 = vector.load %arg2[%c0_1, %c0_2] : memref<16x64xf32, #tpu.memory_space<vmem>>, vector<16x64xf32>
    %c0_3 = arith.constant 0 : index
    %c0_4 = arith.constant 0 : index
    %2 = vector.load %arg7[%c0_3, %c0_4] : memref<8x256xf32, #tpu.memory_space<vmem>>, vector<8x256xf32>
    %3 = vector.extract_strided_slice %2 {offsets = [0, 0], sizes = [1, 256], strides = [1, 1]} : vector<8x256xf32> to vector<1x256xf32>
    %4 = vector.extract_strided_slice %2 {offsets = [1, 0], sizes = [1, 32], strides = [1, 1]} : vector<8x256xf32> to vector<1x32xf32>
    %5 = vector.extract_strided_slice %2 {offsets = [2, 0], sizes = [1, 64], strides = [1, 1]} : vector<8x256xf32> to vector<1x64xf32>
    %6 = vector.extract_strided_slice %2 {offsets = [3, 0], sizes = [1, 128], strides = [1, 1]} : vector<8x256xf32> to vector<1x128xf32>
    %c0_5 = arith.constant 0 : index
    %c0_6 = arith.constant 0 : index
    %7 = tpu.strided_load %arg1[%c0_5, %c0_6] {strides = array<i32: 4, 1>} : memref<16x24xf32, #tpu.memory_space<vmem>>, vector<4x24xf32>
    %c1 = arith.constant 1 : index
    %c0_7 = arith.constant 0 : index
    %8 = tpu.strided_load %arg1[%c1, %c0_7] {strides = array<i32: 4, 1>} : memref<16x24xf32, #tpu.memory_space<vmem>>, vector<4x24xf32>
    %9 = arith.addf %7, %8 : vector<4x24xf32>
    %c2 = arith.constant 2 : index
    %c0_8 = arith.constant 0 : index
    %10 = tpu.strided_load %arg1[%c2, %c0_8] {strides = array<i32: 4, 1>} : memref<16x24xf32, #tpu.memory_space<vmem>>, vector<4x24xf32>
    %11 = arith.addf %9, %10 : vector<4x24xf32>
    %c3 = arith.constant 3 : index
    %c0_9 = arith.constant 0 : index
    %12 = tpu.strided_load %arg1[%c3, %c0_9] {strides = array<i32: 4, 1>} : memref<16x24xf32, #tpu.memory_space<vmem>>, vector<4x24xf32>
    %13 = arith.addf %11, %12 : vector<4x24xf32>
    %cst = arith.constant 2.500000e-01 : f32
    %14 = vector.broadcast %cst : f32 to vector<4x24xf32>
    %15 = arith.mulf %13, %14 : vector<4x24xf32>
    %c0_10 = arith.constant 0 : index
    %c0_11 = arith.constant 0 : index
    %16 = tpu.strided_load %arg10[%c0_10, %c0_11] {strides = array<i32: 4, 1>} : memref<16x24xf32, #tpu.memory_space<vmem>>, vector<4x24xf32>
    tpu.strided_store %arg10[%c0_10, %c0_11], %15 {strides = array<i32: 4, 1>} : memref<16x24xf32, #tpu.memory_space<vmem>>, vector<4x24xf32>
    %c1_12 = arith.constant 1 : index
    %c0_13 = arith.constant 0 : index
    %17 = tpu.strided_load %arg10[%c1_12, %c0_13] {strides = array<i32: 4, 1>} : memref<16x24xf32, #tpu.memory_space<vmem>>, vector<4x24xf32>
    tpu.strided_store %arg10[%c1_12, %c0_13], %15 {strides = array<i32: 4, 1>} : memref<16x24xf32, #tpu.memory_space<vmem>>, vector<4x24xf32>
    %c2_14 = arith.constant 2 : index
    %c0_15 = arith.constant 0 : index
    %18 = tpu.strided_load %arg10[%c2_14, %c0_15] {strides = array<i32: 4, 1>} : memref<16x24xf32, #tpu.memory_space<vmem>>, vector<4x24xf32>
    tpu.strided_store %arg10[%c2_14, %c0_15], %15 {strides = array<i32: 4, 1>} : memref<16x24xf32, #tpu.memory_space<vmem>>, vector<4x24xf32>
    %c3_16 = arith.constant 3 : index
    %c0_17 = arith.constant 0 : index
    %19 = tpu.strided_load %arg10[%c3_16, %c0_17] {strides = array<i32: 4, 1>} : memref<16x24xf32, #tpu.memory_space<vmem>>, vector<4x24xf32>
    tpu.strided_store %arg10[%c3_16, %c0_17], %15 {strides = array<i32: 4, 1>} : memref<16x24xf32, #tpu.memory_space<vmem>>, vector<4x24xf32>
    %20 = arith.truncf %0 : vector<16x24xf32> to vector<16x24xbf16>
    %c0_18 = arith.constant 0 : index
    %c0_19 = arith.constant 0 : index
    %21 = vector.load %arg10[%c0_18, %c0_19] : memref<16x24xf32, #tpu.memory_space<vmem>>, vector<16x24xf32>
    %22 = arith.truncf %21 : vector<16x24xf32> to vector<16x24xbf16>
    %23 = tpu.concatenate %20, %22 in 1 : vector<16x24xbf16>, vector<16x24xbf16> -> vector<16x48xbf16>
    %c0_20 = arith.constant 0 : index
    %c0_21 = arith.constant 0 : index
    %24 = vector.load %arg3[%c0_20, %c0_21] : memref<48x32xbf16, #tpu.memory_space<vmem>>, vector<48x32xbf16>
    %cst_22 = arith.constant dense<0.000000e+00> : vector<16x32xf32>
    %25 = tpu.matmul %23, %24, %cst_22 {dimension_numbers = #tpu.dot_dimension_numbers<[1], [0], [0], [1], [0, 0, 1, 1], [], []>} : vector<16x48xbf16>, vector<48x32xbf16>, vector<16x32xf32> -> vector<16x32xf32>
    %26 = vector.broadcast %4 : vector<1x32xf32> to vector<16x32xf32>
    %27 = arith.addf %25, %26 : vector<16x32xf32>
    %cst_23 = arith.constant 0.000000e+00 : f32
    %28 = vector.broadcast %cst_23 : f32 to vector<16x32xf32>
    %29 = arith.maximumf %27, %28 : vector<16x32xf32>
    %30 = arith.truncf %29 : vector<16x32xf32> to vector<16x32xbf16>
    %31 = tpu.concatenate %30, %20 in 1 : vector<16x32xbf16>, vector<16x24xbf16> -> vector<16x56xbf16>
    %c0_24 = arith.constant 0 : index
    %c0_25 = arith.constant 0 : index
    %32 = vector.load %arg4[%c0_24, %c0_25] : memref<56x64xbf16, #tpu.memory_space<vmem>>, vector<56x64xbf16>
    %cst_26 = arith.constant dense<0.000000e+00> : vector<16x64xf32>
    %33 = tpu.matmul %31, %32, %cst_26 {dimension_numbers = #tpu.dot_dimension_numbers<[1], [0], [0], [1], [0, 0, 1, 1], [], []>} : vector<16x56xbf16>, vector<56x64xbf16>, vector<16x64xf32> -> vector<16x64xf32>
    %34 = vector.broadcast %5 : vector<1x64xf32> to vector<16x64xf32>
    %35 = arith.addf %33, %34 : vector<16x64xf32>
    %cst_27 = arith.constant 0.000000e+00 : f32
    %36 = vector.broadcast %cst_27 : f32 to vector<16x64xf32>
    %37 = arith.maximumf %35, %36 : vector<16x64xf32>
    %38 = arith.truncf %37 : vector<16x64xf32> to vector<16x64xbf16>
    %39 = arith.truncf %1 : vector<16x64xf32> to vector<16x64xbf16>
    %40 = tpu.concatenate %38, %39 in 1 : vector<16x64xbf16>, vector<16x64xbf16> -> vector<16x128xbf16>
    %c0_28 = arith.constant 0 : index
    %c0_29 = arith.constant 0 : index
    %41 = vector.load %arg5[%c0_28, %c0_29] : memref<128x256xbf16, #tpu.memory_space<vmem>>, vector<128x256xbf16>
    %cst_30 = arith.constant dense<0.000000e+00> : vector<16x256xf32>
    %42 = tpu.matmul %40, %41, %cst_30 {dimension_numbers = #tpu.dot_dimension_numbers<[1], [0], [0], [1], [0, 0, 1, 1], [], []>} : vector<16x128xbf16>, vector<128x256xbf16>, vector<16x256xf32> -> vector<16x256xf32>
    %43 = vector.broadcast %3 : vector<1x256xf32> to vector<16x256xf32>
    %44 = arith.addf %42, %43 : vector<16x256xf32>
    %45 = vector.extract_strided_slice %44 {offsets = [0, 0], sizes = [16, 64], strides = [1, 1]} : vector<16x256xf32> to vector<16x64xf32>
    %46 = arith.negf %45 : vector<16x64xf32>
    %47 = math.exp %46 : vector<16x64xf32>
    %cst_31 = arith.constant 1.000000e+00 : f32
    %48 = vector.broadcast %cst_31 : f32 to vector<16x64xf32>
    %49 = arith.addf %48, %47 : vector<16x64xf32>
    %50 = arith.divf %48, %49 : vector<16x64xf32>
    %51 = vector.extract_strided_slice %44 {offsets = [0, 64], sizes = [16, 64], strides = [1, 1]} : vector<16x256xf32> to vector<16x64xf32>
    %52 = arith.negf %51 : vector<16x64xf32>
    %53 = math.exp %52 : vector<16x64xf32>
    %cst_32 = arith.constant 1.000000e+00 : f32
    %54 = vector.broadcast %cst_32 : f32 to vector<16x64xf32>
    %55 = arith.addf %54, %53 : vector<16x64xf32>
    %56 = arith.divf %54, %55 : vector<16x64xf32>
    %57 = vector.extract_strided_slice %44 {offsets = [0, 128], sizes = [16, 64], strides = [1, 1]} : vector<16x256xf32> to vector<16x64xf32>
    %58 = vector.extract_strided_slice %44 {offsets = [0, 192], sizes = [16, 64], strides = [1, 1]} : vector<16x256xf32> to vector<16x64xf32>
    %59 = arith.mulf %50, %58 : vector<16x64xf32>
    %60 = arith.addf %57, %59 : vector<16x64xf32>
    %61 = math.tanh %60 : vector<16x64xf32>
    %cst_33 = arith.constant 1.000000e+00 : f32
    %62 = vector.broadcast %cst_33 : f32 to vector<16x64xf32>
    %63 = arith.subf %62, %56 : vector<16x64xf32>
    %64 = arith.mulf %63, %61 : vector<16x64xf32>
    %65 = arith.mulf %56, %1 : vector<16x64xf32>
    %66 = arith.addf %64, %65 : vector<16x64xf32>
    %c0_34 = arith.constant 0 : index
    %c0_35 = arith.constant 0 : index
    %67 = vector.load %arg9[%c0_34, %c0_35] : memref<16x64xf32, #tpu.memory_space<vmem>>, vector<16x64xf32>
    tpu.vector_store %arg9[%c0_34, %c0_35], %66 {strides = array<i32>} : memref<16x64xf32, #tpu.memory_space<vmem>>, vector<16x64xf32>,
    %68 = arith.truncf %66 : vector<16x64xf32> to vector<16x64xbf16>
    %c0_36 = arith.constant 0 : index
    %c0_37 = arith.constant 0 : index
    %69 = vector.load %arg6[%c0_36, %c0_37] : memref<64x128xbf16, #tpu.memory_space<vmem>>, vector<64x128xbf16>
    %cst_38 = arith.constant dense<0.000000e+00> : vector<16x128xf32>
    %70 = tpu.matmul %68, %69, %cst_38 {dimension_numbers = #tpu.dot_dimension_numbers<[1], [0], [0], [1], [0, 0, 1, 1], [], []>} : vector<16x64xbf16>, vector<64x128xbf16>, vector<16x128xf32> -> vector<16x128xf32>
    %71 = vector.broadcast %6 : vector<1x128xf32> to vector<16x128xf32>
    %72 = arith.addf %70, %71 : vector<16x128xf32>
    %73 = arith.truncf %72 : vector<16x128xf32> to vector<16x128xbf16>
    %c0_39 = arith.constant 0 : index
    %c0_40 = arith.constant 0 : index
    %74 = vector.load %arg8[%c0_39, %c0_40] : memref<16x128xbf16, #tpu.memory_space<vmem>>, vector<16x128xbf16>
    tpu.vector_store %arg8[%c0_39, %c0_40], %73 {strides = array<i32>} : memref<16x128xbf16, #tpu.memory_space<vmem>>, vector<16x128xbf16>,
    return
  }
  func.func @transform_0(%arg0: i32) -> (i32, i32) {
    %c0_i32 = arith.constant 0 : i32
    %c0_i32_0 = arith.constant 0 : i32
    return %arg0, %c0_i32 : i32, i32
  }
  func.func @transform_1(%arg0: i32) -> (i32, i32) {
    %c0_i32 = arith.constant 0 : i32
    %c0_i32_0 = arith.constant 0 : i32
    return %arg0, %c0_i32 : i32, i32
  }
  func.func @transform_2(%arg0: i32) -> (i32, i32) {
    %c0_i32 = arith.constant 0 : i32
    %c0_i32_0 = arith.constant 0 : i32
    %c0_i32_1 = arith.constant 0 : i32
    return %c0_i32, %c0_i32_0 : i32, i32
  }
  func.func @transform_3(%arg0: i32) -> (i32, i32) {
    %c0_i32 = arith.constant 0 : i32
    %c0_i32_0 = arith.constant 0 : i32
    %c0_i32_1 = arith.constant 0 : i32
    return %c0_i32, %c0_i32_0 : i32, i32
  }
  func.func @transform_4(%arg0: i32) -> (i32, i32) {
    %c0_i32 = arith.constant 0 : i32
    %c0_i32_0 = arith.constant 0 : i32
    %c0_i32_1 = arith.constant 0 : i32
    return %c0_i32, %c0_i32_0 : i32, i32
  }
  func.func @transform_5(%arg0: i32) -> (i32, i32) {
    %c0_i32 = arith.constant 0 : i32
    %c0_i32_0 = arith.constant 0 : i32
    %c0_i32_1 = arith.constant 0 : i32
    return %c0_i32, %c0_i32_0 : i32, i32
  }
  func.func @transform_6(%arg0: i32) -> (i32, i32) {
    %c0_i32 = arith.constant 0 : i32
    %c0_i32_0 = arith.constant 0 : i32
    %c0_i32_1 = arith.constant 0 : i32
    return %c0_i32, %c0_i32_0 : i32, i32
  }
  func.func @transform_7(%arg0: i32) -> (i32, i32) {
    %c0_i32 = arith.constant 0 : i32
    %c0_i32_0 = arith.constant 0 : i32
    return %arg0, %c0_i32 : i32, i32
  }
  func.func @transform_8(%arg0: i32) -> (i32, i32) {
    %c0_i32 = arith.constant 0 : i32
    %c0_i32_0 = arith.constant 0 : i32
    return %arg0, %c0_i32 : i32, i32
  }
}

</mosaic_0001>

<llo_original>
// kernel: actor_gnn_forward.1
$region0: #{actor_gnn_forward.1}
  #allocation0 [shape = 'u32[]', space=smem, size = 0x4, offset = 0x4, fixed_abs, tag = 'smem constant byte address 0x4 - core index']
  #allocation1 [shape = 'u32[144,128]{1,0:T(1,128)}', space=vmem, size = 0x12000, scoped, tag = 'internal scratch']
  #allocation2 [shape = 'f32[16,24]{1,0:T(8,128)}', space=vmem, size = 0x2000, scoped, tag = 'scratch operand']
  %s0 = inlined_call_operand.vmem [shape: f32[32,24], index: 0, kind: input, shape index: {}]
  %s1 = inlined_call_operand.vmem [shape: f32[32,64], index: 1, kind: input, shape index: {}, may-alias: {1,8}]
  %s2 = inlined_call_operand.vmem [shape: bf16[48,32], index: 2, kind: input, shape index: {}]
  %s3 = inlined_call_operand.vmem [shape: bf16[56,64], index: 3, kind: input, shape index: {}]
  %s4 = inlined_call_operand.vmem [shape: bf16[128,256], index: 4, kind: input, shape index: {}]
  %s5 = inlined_call_operand.vmem [shape: bf16[64,128], index: 5, kind: input, shape index: {}]
  %s6 = inlined_call_operand.vmem [shape: f32[8,256], index: 6, kind: input, shape index: {}]
  %s7 = inlined_call_operand.vmem [shape: bf16[32,128], index: 7, kind: output, shape index: {0}]
  %s8 = inlined_call_operand.vmem [shape: f32[32,64], index: 8, kind: output, shape index: {1}, may-alias: {1,8}]
  %9 = xla_tuple %s7, %s8
  %s10 = sld [smem:[#allocation0]]
  $region69: #{actor_gnn_forward.1} parent=0
    _
  %s12 = ssub.s32 1, %s10
  %s13 = scalar_select 0, %s12, %s10
  loop: start=0, step=1, limit=4
  $region2: #{actor_gnn_forward.1} parent=0 // loop_pre_header
    _
  $region3: #{actor_gnn_forward.1} parent=0 // loop_header
    %s15 = sphi 0, %s19
    %p16 = scmp.ge.s32.totalorder %s15, 4
    %s25 = sphi 0, %s27
    %s28 = sphi 0, %s25
    %s29 = sphi 0, %s28
    %s45 = sphi 0, %s29
    %s51 = sphi 0, %s53
    %s54 = sphi 0, %s51
    %s55 = sphi 0, %s54
    %s71 = sphi 0, %s55
    %s75 = sphi 0, %s75
    %s77 = sphi 0, %s75
    %s78 = sphi 0, %s77
    %s92 = sphi 0, %s78
    %s96 = sphi 0, %s96
    %s98 = sphi 0, %s96
    %s99 = sphi 0, %s98
    %s113 = sphi 0, %s99
    %s117 = sphi 0, %s117
    %s119 = sphi 0, %s117
    %s120 = sphi 0, %s119
    %s134 = sphi 0, %s120
    %s138 = sphi 0, %s138
    %s140 = sphi 0, %s138
    %s141 = sphi 0, %s140
    %s155 = sphi 0, %s141
    %s159 = sphi 0, %s159
    %s161 = sphi 0, %s159
    %s162 = sphi 0, %s161
    %s176 = sphi 0, %s162
    %s182 = sphi 0, %s184
    %s185 = sphi 0, %s182
    %s186 = sphi 0, %s185
    %s202 = sphi 0, %s186
    %s208 = sphi 0, %s210
    %s211 = sphi 0, %s208
    %s212 = sphi 0, %s211
    %s228 = sphi 0, %s212
  $region4: #{actor_gnn_forward.1} parent=0 // loop_header_branch
    %18 = sbr.rel (%p16) target = $region8
  $region5: #{actor_gnn_forward.1} parent=0 // loop_body
    %s20 = ssub.s32 %s15, 1
    %s21 = ssub.s32 %s15, 2
    %s22 = sadd.s32 %s15, 1
    %s23 = ssub.s32 %s15, %s22
    %p24 = scmp.eq.s32.totalorder %s23, 0
    %s26 = sadd.s32 %s25, 1
    %s27 = scalar_select %p24, %s25, %s26
    %p30 = pneg %p24
    %p31 = scmp.eq.s32.totalorder %s15, 1
    %p32 = por %p30, %p31
    %p33 = scmp.ne.s32.totalorder %s25, %s28
    %p34 = scmp.eq.s32.totalorder %s15, 0
    %p35 = por %p33, %p34
    %p36 = scmp.ne.s32.totalorder %s25, %s28
    %p37 = scmp.eq.s32.totalorder %s20, 1
    %p38 = por %p36, %p37
    %p39 = scmp.ne.s32.totalorder %s28, %s29
    %p40 = scmp.eq.s32.totalorder %s20, 0
    %p41 = por %p39, %p40
    %p42 = scmp.ne.s32.totalorder %s28, %s29
    %p43 = scmp.eq.s32.totalorder %s21, 1
    %p44 = por %p42, %p43
    %p46 = scmp.ne.s32.totalorder %s29, %s45
    %p47 = scmp.eq.s32.totalorder %s21, 0
    %p48 = por %p46, %p47
    %s49 = ssub.s32 %s15, %s22
    %p50 = scmp.eq.s32.totalorder %s49, 0
    %s52 = sadd.s32 %s51, 1
    %s53 = scalar_select %p50, %s51, %s52
    %p56 = pneg %p50
    %p57 = scmp.eq.s32.totalorder %s15, 1
    %p58 = por %p56, %p57
    %p59 = scmp.ne.s32.totalorder %s51, %s54
    %p60 = scmp.eq.s32.totalorder %s15, 0
    %p61 = por %p59, %p60
    %p62 = scmp.ne.s32.totalorder %s51, %s54
    %p63 = scmp.eq.s32.totalorder %s20, 1
    %p64 = por %p62, %p63
    %p65 = scmp.ne.s32.totalorder %s54, %s55
    %p66 = scmp.eq.s32.totalorder %s20, 0
    %p67 = por %p65, %p66
    %p68 = scmp.ne.s32.totalorder %s54, %s55
    %p69 = scmp.eq.s32.totalorder %s21, 1
    %p70 = por %p68, %p69
    %p72 = scmp.ne.s32.totalorder %s55, %s71
    %p73 = scmp.eq.s32.totalorder %s21, 0
    %p74 = por %p72, %p73
    %s76 = sadd.s32 %s75, 1
    %p79 = scmp.eq.s32.totalorder %s15, 1
    %p80 = scmp.ne.s32.totalorder %s75, %s77
    %p81 = scmp.eq.s32.totalorder %s15, 0
    %p82 = por %p80, %p81
    %p83 = scmp.ne.s32.totalorder %s75, %s77
    %p84 = scmp.eq.s32.totalorder %s20, 1
    %p85 = por %p83, %p84
    %p86 = scmp.ne.s32.totalorder %s77, %s78
    %p87 = scmp.eq.s32.totalorder %s20, 0
    %p88 = por %p86, %p87
    %p89 = scmp.ne.s32.totalorder %s77, %s78
    %p90 = scmp.eq.s32.totalorder %s21, 1
    %p91 = por %p89, %p90
    %p93 = scmp.ne.s32.totalorder %s78, %s92
    %p94 = scmp.eq.s32.totalorder %s21, 0
    %p95 = por %p93, %p94
    %s97 = sadd.s32 %s96, 1
    %p100 = scmp.eq.s32.totalorder %s15, 1
    %p101 = scmp.ne.s32.totalorder %s96, %s98
    %p102 = scmp.eq.s32.totalorder %s15, 0
    %p103 = por %p101, %p102
    %p104 = scmp.ne.s32.totalorder %s96, %s98
    %p105 = scmp.eq.s32.totalorder %s20, 1
    %p106 = por %p104, %p105
    %p107 = scmp.ne.s32.totalorder %s98, %s99
    %p108 = scmp.eq.s32.totalorder %s20, 0
    %p109 = por %p107, %p108
    %p110 = scmp.ne.s32.totalorder %s98, %s99
    %p111 = scmp.eq.s32.totalorder %s21, 1
    %p112 = por %p110, %p111
    %p114 = scmp.ne.s32.totalorder %s99, %s113
    %p115 = scmp.eq.s32.totalorder %s21, 0
    %p116 = por %p114, %p115
    %s118 = sadd.s32 %s117, 1
    %p121 = scmp.eq.s32.totalorder %s15, 1
    %p122 = scmp.ne.s32.totalorder %s117, %s119
    %p123 = scmp.eq.s32.totalorder %s15, 0
    %p124 = por %p122, %p123
    %p125 = scmp.ne.s32.totalorder %s117, %s119
    %p126 = scmp.eq.s32.totalorder %s20, 1
    %p127 = por %p125, %p126
    %p128 = scmp.ne.s32.totalorder %s119, %s120
    %p129 = scmp.eq.s32.totalorder %s20, 0
    %p130 = por %p128, %p129
    %p131 = scmp.ne.s32.totalorder %s119, %s120
    %p132 = scmp.eq.s32.totalorder %s21, 1
    %p133 = por %p131, %p132
    %p135 = scmp.ne.s32.totalorder %s120, %s134
    %p136 = scmp.eq.s32.totalorder %s21, 0
    %p137 = por %p135, %p136
    %s139 = sadd.s32 %s138, 1
    %p142 = scmp.eq.s32.totalorder %s15, 1
    %p143 = scmp.ne.s32.totalorder %s138, %s140
    %p144 = scmp.eq.s32.totalorder %s15, 0
    %p145 = por %p143, %p144
    %p146 = scmp.ne.s32.totalorder %s138, %s140
    %p147 = scmp.eq.s32.totalorder %s20, 1
    %p148 = por %p146, %p147
    %p149 = scmp.ne.s32.totalorder %s140, %s141
    %p150 = scmp.eq.s32.totalorder %s20, 0
    %p151 = por %p149, %p150
    %p152 = scmp.ne.s32.totalorder %s140, %s141
    %p153 = scmp.eq.s32.totalorder %s21, 1
    %p154 = por %p152, %p153
    %p156 = scmp.ne.s32.totalorder %s141, %s155
    %p157 = scmp.eq.s32.totalorder %s21, 0
    %p158 = por %p156, %p157
    %s160 = sadd.s32 %s159, 1
    %p163 = scmp.eq.s32.totalorder %s15, 1
    %p164 = scmp.ne.s32.totalorder %s159, %s161
    %p165 = scmp.eq.s32.totalorder %s15, 0
    %p166 = por %p164, %p165
    %p167 = scmp.ne.s32.totalorder %s159, %s161
    %p168 = scmp.eq.s32.totalorder %s20, 1
    %p169 = por %p167, %p168
    %p170 = scmp.ne.s32.totalorder %s161, %s162
    %p171 = scmp.eq.s32.totalorder %s20, 0
    %p172 = por %p170, %p171
    %p173 = scmp.ne.s32.totalorder %s161, %s162
    %p174 = scmp.eq.s32.totalorder %s21, 1
    %p175 = por %p173, %p174
    %p177 = scmp.ne.s32.totalorder %s162, %s176
    %p178 = scmp.eq.s32.totalorder %s21, 0
    %p179 = por %p177, %p178
    %s180 = ssub.s32 %s15, %s22
    %p181 = scmp.eq.s32.totalorder %s180, 0
    %s183 = sadd.s32 %s182, 1
    %s184 = scalar_select %p181, %s182, %s183
    %p187 = pneg %p181
    %p188 = scmp.eq.s32.totalorder %s15, 1
    %p189 = por %p187, %p188
    %p190 = scmp.ne.s32.totalorder %s182, %s185
    %p191 = scmp.eq.s32.totalorder %s15, 0
    %p192 = por %p190, %p191
    %p193 = scmp.ne.s32.totalorder %s182, %s185
    %p194 = scmp.eq.s32.totalorder %s20, 1
    %p195 = por %p193, %p194
    %p196 = scmp.ne.s32.totalorder %s185, %s186
    %p197 = scmp.eq.s32.totalorder %s20, 0
    %p198 = por %p196, %p197
    %p199 = scmp.ne.s32.totalorder %s185, %s186
    %p200 = scmp.eq.s32.totalorder %s21, 1
    %p201 = por %p199, %p200
    %p203 = scmp.ne.s32.totalorder %s186, %s202
    %p204 = scmp.eq.s32.totalorder %s21, 0
    %p205 = por %p203, %p204
    %s206 = ssub.s32 %s15, %s22
    %p207 = scmp.eq.s32.totalorder %s206, 0
    %s209 = sadd.s32 %s208, 1
    %s210 = scalar_select %p207, %s208, %s209
    %p213 = pneg %p207
    %p214 = scmp.eq.s32.totalorder %s15, 1
    %p215 = por %p213, %p214
    %p216 = scmp.ne.s32.totalorder %s208, %s211
    %p217 = scmp.eq.s32.totalorder %s15, 0
    %p218 = por %p216, %p217
    %p219 = scmp.ne.s32.totalorder %s208, %s211
    %p220 = scmp.eq.s32.totalorder %s20, 1
    %p221 = por %p219, %p220
    %p222 = scmp.ne.s32.totalorder %s211, %s212
    %p223 = scmp.eq.s32.totalorder %s20, 0
    %p224 = por %p222, %p223
    %p225 = scmp.ne.s32.totalorder %s211, %s212
    %p226 = scmp.eq.s32.totalorder %s21, 1
    %p227 = por %p225, %p226
    %p229 = scmp.ne.s32.totalorder %s212, %s228
    %p230 = scmp.eq.s32.totalorder %s21, 0
    %p231 = por %p229, %p230
    %p232 = scmp.le.s32.totalorder 1, %s15
    %p233 = scmp.lt.s32.totalorder %s15, 3
    %p234 = pnand %p232, %p233
    %p235 = pneg %p234
    // Predicated region
    $region9: #{actor_gnn_forward.1} parent=5 // pred_check
      _
    $region10: #{actor_gnn_forward.1} parent=5 // pred_check_branch
      %237 = sbr.rel (%p234) target = $region12
    $region11: #{actor_gnn_forward.1} parent=5 // pred_region
      %s238 = ssub.s32 %s15, 1
      // Predicated region
      $region13: #{actor_gnn_forward.1} parent=11 // pred_check
        %p239 = pneg %p88
      $region14: #{actor_gnn_forward.1} parent=11 // pred_check_branch
        %241 = sbr.rel (%p239) target = $region16
      $region15: #{actor_gnn_forward.1} parent=11 // pred_region
        _
      $region16: #{actor_gnn_forward.1} parent=11 // pred_fallthru
        _
      // Predicated region
      $region17: #{actor_gnn_forward.1} parent=11 // pred_check
        %p242 = pneg %p109
      $region18: #{actor_gnn_forward.1} parent=11 // pred_check_branch
        %244 = sbr.rel (%p242) target = $region20
      $region19: #{actor_gnn_forward.1} parent=11 // pred_region
        _
      $region20: #{actor_gnn_forward.1} parent=11 // pred_fallthru
        _
      // Predicated region
      $region21: #{actor_gnn_forward.1} parent=11 // pred_check
        %p245 = pneg %p130
      $region22: #{actor_gnn_forward.1} parent=11 // pred_check_branch
        %247 = sbr.rel (%p245) target = $region24
      $region23: #{actor_gnn_forward.1} parent=11 // pred_region
        _
      $region24: #{actor_gnn_forward.1} parent=11 // pred_fallthru
        _
      // Predicated region
      $region25: #{actor_gnn_forward.1} parent=11 // pred_check
        %p248 = pneg %p151
      $region26: #{actor_gnn_forward.1} parent=11 // pred_check_branch
        %250 = sbr.rel (%p248) target = $region28
      $region27: #{actor_gnn_forward.1} parent=11 // pred_region
        _
      $region28: #{actor_gnn_forward.1} parent=11 // pred_fallthru
        _
      // Predicated region
      $region29: #{actor_gnn_forward.1} parent=11 // pred_check
        %p251 = pneg %p172
      $region30: #{actor_gnn_forward.1} parent=11 // pred_check_branch
        %253 = sbr.rel (%p251) target = $region32
      $region31: #{actor_gnn_forward.1} parent=11 // pred_region
        _
      $region32: #{actor_gnn_forward.1} parent=11 // pred_fallthru
        _
    $region12: #{actor_gnn_forward.1} parent=5 // pred_fallthru
      _
    %p254 = scmp.lt.s32.totalorder %s15, 2
    // Predicated region
    $region33: #{actor_gnn_forward.1} parent=5 // pred_check
      %p255 = pneg %p254
    $region34: #{actor_gnn_forward.1} parent=5 // pred_check_branch
      %257 = sbr.rel (%p255) target = $region36
    $region35: #{actor_gnn_forward.1} parent=5 // pred_region
      // Predicated region
      $region37: #{actor_gnn_forward.1} parent=35 // pred_check
        %p258 = pneg %p35
      $region38: #{actor_gnn_forward.1} parent=35 // pred_check_branch
        %260 = sbr.rel (%p258) target = $region40
      $region39: #{actor_gnn_forward.1} parent=35 // pred_region
        %s261 = smul.u32 2, %s15
        %p262 = scmp.lt.s32.totalorder %s261, 3
        %s263 = scalar_select %p262, %s261, 3
        %s264 = smul.addr %s263, 8
        %s265 = scalar_lea.vmem %s0, %s264
        %s266 = smul.u32 2, %s15
      $region40: #{actor_gnn_forward.1} parent=35 // pred_fallthru
        _
      // Predicated region
      $region41: #{actor_gnn_forward.1} parent=35 // pred_check
        %p267 = pneg %p61
      $region42: #{actor_gnn_forward.1} parent=35 // pred_check_branch
        %269 = sbr.rel (%p267) target = $region44
      $region43: #{actor_gnn_forward.1} parent=35 // pred_region
        %s270 = smul.u32 2, %s15
        %p271 = scmp.lt.s32.totalorder %s270, 3
        %s272 = scalar_select %p271, %s270, 3
        %s273 = smul.addr %s272, 8
        %s274 = scalar_lea.vmem %s1, %s273
        %s275 = smul.u32 2, %s15
      $region44: #{actor_gnn_forward.1} parent=35 // pred_fallthru
        _
    $region36: #{actor_gnn_forward.1} parent=5 // pred_fallthru
      _
    %p276 = scmp.le.s32.totalorder 1, %s15
    %p277 = scmp.lt.s32.totalorder %s15, 3
    %p278 = pnand %p276, %p277
    %p279 = pneg %p278
    // Predicated region
    $region45: #{actor_gnn_forward.1} parent=5 // pred_check
      _
    $region46: #{actor_gnn_forward.1} parent=5 // pred_check_branch
      %281 = sbr.rel (%p278) target = $region48
    $region47: #{actor_gnn_forward.1} parent=5 // pred_region
      %s282 = ssub.s32 %s15, 1
      %s283 = smul.u32 2, %s20
      %p284 = scmp.lt.s32.totalorder %s283, 3
      %s285 = scalar_select %p284, %s283, 3
      %s286 = smul.addr %s285, 8
      %s287 = scalar_lea.vmem %s0, %s286
      %p288 = pneg %p41
      %p289 = pneg %p38
      %s290 = smul.u32 2, %s20
      %p291 = scmp.lt.s32.totalorder %s290, 3
      %s292 = scalar_select %p291, %s290, 3
      %s293 = smul.addr %s292, 8
      %s294 = scalar_lea.vmem %s1, %s293
      %p295 = pneg %p67
      %p296 = pneg %p64
      %p297 = pneg %p88
      %p298 = pneg %p85
      %p299 = pneg %p109
      %p300 = pneg %p106
      %p301 = pneg %p130
      %p302 = pneg %p127
      %p303 = pneg %p151
      %p304 = pneg %p148
      %p305 = pneg %p172
      %p306 = pneg %p169
      %p307 = pneg %p198
      %p308 = pneg %p195
      %s309 = smul.u32 2, %s20
      %p310 = scmp.lt.s32.totalorder %s309, 3
      %s311 = scalar_select %p310, %s309, 3
      %s312 = smul.addr %s311, 4
      %s313 = scalar_lea.vmem %s7, %s312
      %p314 = pneg %p224
      %p315 = pneg %p221
      %s316 = smul.u32 2, %s20
      %p317 = scmp.lt.s32.totalorder %s316, 3
      %s318 = scalar_select %p317, %s316, 3
      %s319 = smul.addr %s318, 8
      %s320 = scalar_lea.vmem %s8, %s319
      %s321 = smul.u32 2, %s20
      %p322 = scmp.lt.s32.totalorder %s321, 3
      %s323 = scalar_select %p322, %s321, 3
      %s324 = smul.addr %s323, 8
      %s325 = scalar_lea.vmem %s0, %s324
      %s326 = smul.u32 2, %s20
      %s327 = smul.u32 2, %s20
      %p328 = scmp.lt.s32.totalorder %s327, 3
      %s329 = scalar_select %p328, %s327, 3
      %s330 = smul.addr %s329, 8
      %s331 = scalar_lea.vmem %s1, %s330
      %s332 = smul.u32 2, %s20
      %s333 = smul.u32 2, %s20
      %p334 = scmp.lt.s32.totalorder %s333, 3
      %s335 = scalar_select %p334, %s333, 3
      %s336 = smul.addr %s335, 4
      %s337 = scalar_lea.vmem %s7, %s336
      %s338 = smul.u32 2, %s20
      %s339 = smul.u32 2, %s20
      %p340 = scmp.lt.s32.totalorder %s339, 3
      %s341 = scalar_select %p340, %s339, 3
      %s342 = smul.addr %s341, 8
      %s343 = scalar_lea.vmem %s8, %s342
      %s344 = smul.u32 2, %s20
      %v346 = vld [vmem:[%s325] sm:$0xff]
      %v347 = vld [vmem:[%s325 + $0x8] sm:$0xff]
      %v348 = vld [vmem:[%s331] sm:$0xff]
      %v349 = vld [vmem:[%s331 + $0x8] sm:$0xff]
      %v350 = vld [vmem:[%s6] sm:$0xff]
      %v351 = vld [vmem:[%s6 + $0x8] sm:$0xff]
      %v352 = vld [vmem:[%s325] ss:$4 sm:$0xf]
      %s353 = scalar_lea.vmem %s325, 1
      %v354 = vld [vmem:[%s353] ss:$4 sm:$0xf]
      %v355 = vadd.f32 %v352, %v354
      %s356 = scalar_lea.vmem %s325, 2
      %v357 = vld [vmem:[%s356] ss:$4 sm:$0xf]
      %v358 = vadd.f32 %v355, %v357
      %s359 = scalar_lea.vmem %s325, 3
      %v360 = vld [vmem:[%s359] ss:$4 sm:$0xf]
      %v361 = vadd.f32 %v358, %v360
      %v362 = vmul.f32 %v361, 0.25
      %363 = vst [vmem:[#allocation2] ss:$4 sm:$0xf] %v362
      %s364 = scalar_lea.vmem [#allocation2], 1
      %365 = vst [vmem:[%s364] ss:$4 sm:$0xf] %v362
      %s366 = scalar_lea.vmem [#allocation2], 2
      %367 = vst [vmem:[%s366] ss:$4 sm:$0xf] %v362
      %s368 = scalar_lea.vmem [#allocation2], 3
      %369 = vst [vmem:[%s368] ss:$4 sm:$0xf] %v362
      %v370 = vpack.c.bf16 %v347, %v346
      %v371 = vld [vmem:[#allocation2] sm:$0xff]
      %v372 = vld [vmem:[#allocation2 + $0x8] sm:$0xff]
      %v373 = vpack.c.bf16 %v372, %v371
      %375 = vrot.lane.b32.xlu0 %v373, 24
      %v376 = vpop.permute.xlu0 %375
      %vm377 = vcmask 195584
      %v380 = vsel %vm377, %v370, %v376
      %v381 = vld [vmem:[%s2] sm:$0xf]
      %v382 = vld [vmem:[%s2 + $0x4] sm:$0xf]
      %v383 = vld [vmem:[%s2 + $0x8] sm:$0xf]
      %v384 = vld [vmem:[%s2 + $0xc] sm:$0xf]
      %v385 = vld [vmem:[%s2 + $0x10] sm:$0xf]
      %v386 = vld [vmem:[%s2 + $0x14] sm:$0xf]
      %v387 = vlaneseq
      %v388 = vshrl.u32 %v387, 7
      %v389 = vsub.s32 1, %v388
      %v390 = vrot.slane %v350, %v389
      %v397 = vunpack.c.l.b16 %v381
      %v398 = vunpack.c.l.b16 %v382
      %v399 = vunpack.c.l.b16 %v383
      %v400 = vunpack.c.l.b16 %v384
      %v401 = vunpack.c.l.b16 %v385
      %v402 = vunpack.c.l.b16 %v386
      %v403 = vpack.c.b16 %v398, %v397
      %v404 = vpack.c.b16 %v400, %v399
      %v405 = vpack.c.b16 %v402, %v401
      %vm409 = vcmask 392192
      %v410 = vsel %vm409, %v380, 0
      %412 = vmatprep.subr.bf16.mxu0 0
      %413 = vmatpush1.bf16.msra.mxu0 %v403
      %414 = vmatprep.subr.bf16.mxu0 0
      %415 = vmatpush1.bf16.msra.mxu0 %v404
      %416 = vmatprep.subr.bf16.mxu0 0
      %417 = vmatpush1.bf16.msra.mxu0 %v405
      %418 = vmatprep.subr.bf16.mxu0 0
      %419 = vmatpush1.bf16.msra.mxu0 0
      %420 = vmatprep.subr.bf16.mxu0 0
      %421 = vmatpush1.bf16.msra.mxu0 0
      %422 = vmatprep.subr.bf16.mxu0 0
      %423 = vmatpush1.bf16.msra.mxu0 0
      %424 = vmatprep.subr.bf16.mxu0 0
      %425 = vmatpush1.bf16.msra.mxu0 0
      %426 = vmatprep.subr.bf16.mxu0 0
      %427 = vmatpush1.bf16.msra.mxu0 0
      %428 = vmatprep.subr.bf16.mxu0 0
      %429 = vmatpush1.bf16.msra.mxu0 0
      %430 = vmatprep.subr.bf16.mxu0 0
      %431 = vmatpush1.bf16.msra.mxu0 0
      %432 = vmatprep.subr.bf16.mxu0 0
      %433 = vmatpush1.bf16.msra.mxu0 0
      %434 = vmatprep.subr.bf16.mxu0 0
      %435 = vmatpush1.bf16.msra.mxu0 0
      %436 = vmatprep.subr.bf16.mxu0 0
      %437 = vmatpush1.bf16.msra.mxu0 0
      %438 = vmatprep.subr.bf16.mxu0 0
      %439 = vmatpush1.bf16.msra.mxu0 0
      %440 = vmatprep.subr.bf16.mxu0 0
      %441 = vmatpush1.bf16.msra.mxu0 0
      %442 = vmatprep.subr.bf16.mxu0 0
      %443 = vmatpush1.bf16.msra.mxu0 0
      %444 = vmatprep.mubr.bf16.mxu0 0
      %445 = vmatmul.mubr.bf16.gmra.mrb[0].mxu0 %v410
      %v446 = vpop.f32.mrb[0].mxu0
      %v447 = vadd.f32 %v390, %v446
      %v448 = vpop.f32.mrb[0].mxu0
      %v449 = vpop.f32.mrb[0].mxu0
      %v450 = vadd.f32 %v390, %v449
      %v451 = vpop.f32.mrb[0].mxu0
      %452 = vdwg.mxu0
      %v453 = vmax.f32 %v447, 0.0
      %v454 = vmax.f32 %v450, 0.0
      %v455 = vpack.c.bf16 %v454, %v453
      %457 = vrot.lane.b32.xlu0 %v370, 32
      %v458 = vpop.permute.xlu0 %457
      %vm459 = vcmask 261120
      %v462 = vsel %vm459, %v455, %v458
      %v463 = vld [vmem:[%s3] sm:$0xf]
      %v464 = vld [vmem:[%s3 + $0x4] sm:$0xf]
      %v465 = vld [vmem:[%s3 + $0x8] sm:$0xf]
      %v466 = vld [vmem:[%s3 + $0xc] sm:$0xf]
      %v467 = vld [vmem:[%s3 + $0x10] sm:$0xf]
      %v468 = vld [vmem:[%s3 + $0x14] sm:$0xf]
      %v469 = vld [vmem:[%s3 + $0x18] sm:$0xf]
      %v470 = vlaneseq
      %v471 = vshrl.u32 %v470, 7
      %v472 = vsub.s32 2, %v471
      %v473 = vrot.slane %v350, %v472
      %v481 = vunpack.c.l.b16 %v463
      %v482 = vunpack.c.l.b16 %v464
      %v483 = vunpack.c.l.b16 %v465
      %v484 = vunpack.c.l.b16 %v466
      %v485 = vunpack.c.l.b16 %v467
      %v486 = vunpack.c.l.b16 %v468
      %v487 = vunpack.c.l.b16 %v469
      %v488 = vpack.c.b16 %v482, %v481
      %v489 = vpack.c.b16 %v484, %v483
      %v490 = vpack.c.b16 %v486, %v485
      %v491 = vpack.c.b16 %v487, %v487
      %vm495 = vcmask 457728
      %v496 = vsel %vm495, %v462, 0
      %vm498 = vcmask 1043456
      %v500 = vsel %vm498, %v491, 0
      %502 = vmatprep.subr.bf16.mxu0 0
      %503 = vmatpush1.bf16.msra.mxu0 %v488
      %504 = vmatprep.subr.bf16.mxu0 0
      %505 = vmatpush1.bf16.msra.mxu0 %v489
      %506 = vmatprep.subr.bf16.mxu0 0
      %507 = vmatpush1.bf16.msra.mxu0 %v490
      %508 = vmatprep.subr.bf16.mxu0 0
      %509 = vmatpush1.bf16.msra.mxu0 %v500
      %510 = vmatprep.subr.bf16.mxu0 0
      %511 = vmatpush1.bf16.msra.mxu0 0
      %512 = vmatprep.subr.bf16.mxu0 0
      %513 = vmatpush1.bf16.msra.mxu0 0
      %514 = vmatprep.subr.bf16.mxu0 0
      %515 = vmatpush1.bf16.msra.mxu0 0
      %516 = vmatprep.subr.bf16.mxu0 0
      %517 = vmatpush1.bf16.msra.mxu0 0
      %518 = vmatprep.subr.bf16.mxu0 0
      %519 = vmatpush1.bf16.msra.mxu0 0
      %520 = vmatprep.subr.bf16.mxu0 0
      %521 = vmatpush1.bf16.msra.mxu0 0
      %522 = vmatprep.subr.bf16.mxu0 0
      %523 = vmatpush1.bf16.msra.mxu0 0
      %524 = vmatprep.subr.bf16.mxu0 0
      %525 = vmatpush1.bf16.msra.mxu0 0
      %526 = vmatprep.subr.bf16.mxu0 0
      %527 = vmatpush1.bf16.msra.mxu0 0
      %528 = vmatprep.subr.bf16.mxu0 0
      %529 = vmatpush1.bf16.msra.mxu0 0
      %530 = vmatprep.subr.bf16.mxu0 0
      %531 = vmatpush1.bf16.msra.mxu0 0
      %532 = vmatprep.subr.bf16.mxu0 0
      %533 = vmatpush1.bf16.msra.mxu0 0
      %534 = vmatprep.mubr.bf16.mxu0 0
      %535 = vmatmul.mubr.bf16.gmra.mrb[0].mxu0 %v496
      %v536 = vpop.f32.mrb[0].mxu0
      %v537 = vadd.f32 %v473, %v536
      %v538 = vpop.f32.mrb[0].mxu0
      %v539 = vpop.f32.mrb[0].mxu0
      %v540 = vadd.f32 %v473, %v539
      %v541 = vpop.f32.mrb[0].mxu0
      %542 = vdwg.mxu0
      %v543 = vmax.f32 %v537, 0.0
      %v544 = vmax.f32 %v540, 0.0
      %v545 = vpack.c.bf16 %v544, %v543
      %v546 = vpack.c.bf16 %v349, %v348
      %548 = vrot.lane.b32.xlu0 %v546, 64
      %v549 = vpop.permute.xlu0 %548
      %vm550 = vcmask 523264
      %v553 = vsel %vm550, %v545, %v549
      %v555 = vld [vmem:[%s4] sm:$0xff]
      %v556 = vld [vmem:[%s4 + $0x8] sm:$0xff]
      %v557 = vld [vmem:[%s4 + $0x10] sm:$0xff]
      %v558 = vld [vmem:[%s4 + $0x18] sm:$0xff]
      %v559 = vld [vmem:[%s4 + $0x20] sm:$0xff]
      %v560 = vld [vmem:[%s4 + $0x28] sm:$0xff]
      %v561 = vld [vmem:[%s4 + $0x30] sm:$0xff]
      %v562 = vld [vmem:[%s4 + $0x38] sm:$0xff]
      %v563 = vld [vmem:[%s4 + $0x40] sm:$0xff]
      %v564 = vld [vmem:[%s4 + $0x48] sm:$0xff]
      %v565 = vld [vmem:[%s4 + $0x50] sm:$0xff]
      %v566 = vld [vmem:[%s4 + $0x58] sm:$0xff]
      %v567 = vld [vmem:[%s4 + $0x60] sm:$0xff]
      %v568 = vld [vmem:[%s4 + $0x68] sm:$0xff]
      %v569 = vld [vmem:[%s4 + $0x70] sm:$0xff]
      %v570 = vld [vmem:[%s4 + $0x78] sm:$0xff]
      %v571 = vlaneseq
      %v572 = vshrl.u32 %v571, 7
      %v573 = vsub.s32 0, %v572
      %v574 = vrot.slane %v350, %v573
      %v575 = vlaneseq
      %v576 = vshrl.u32 %v575, 7
      %v577 = vsub.s32 0, %v576
      %v578 = vrot.slane %v351, %v577
      %v595 = vunpack.c.l.b16 %v555
      %v596 = vunpack.c.h.b16 %v555
      %v597 = vunpack.c.l.b16 %v556
      %v598 = vunpack.c.h.b16 %v556
      %v599 = vunpack.c.l.b16 %v557
      %v600 = vunpack.c.h.b16 %v557
      %v601 = vunpack.c.l.b16 %v558
      %v602 = vunpack.c.h.b16 %v558
      %v603 = vunpack.c.l.b16 %v559
      %v604 = vunpack.c.h.b16 %v559
      %v605 = vunpack.c.l.b16 %v560
      %v606 = vunpack.c.h.b16 %v560
      %v607 = vunpack.c.l.b16 %v561
      %v608 = vunpack.c.h.b16 %v561
      %v609 = vunpack.c.l.b16 %v562
      %v610 = vunpack.c.h.b16 %v562
      %v611 = vunpack.c.l.b16 %v563
      %v612 = vunpack.c.h.b16 %v563
      %v613 = vunpack.c.l.b16 %v564
      %v614 = vunpack.c.h.b16 %v564
      %v615 = vunpack.c.l.b16 %v565
      %v616 = vunpack.c.h.b16 %v565
      %v617 = vunpack.c.l.b16 %v566
      %v618 = vunpack.c.h.b16 %v566
      %v619 = vunpack.c.l.b16 %v567
      %v620 = vunpack.c.h.b16 %v567
      %v621 = vunpack.c.l.b16 %v568
      %v622 = vunpack.c.h.b16 %v568
      %v623 = vunpack.c.l.b16 %v569
      %v624 = vunpack.c.h.b16 %v569
      %v625 = vunpack.c.l.b16 %v570
      %v626 = vunpack.c.h.b16 %v570
      %v627 = vpack.c.b16 %v597, %v595
      %v628 = vpack.c.b16 %v598, %v596
      %v629 = vpack.c.b16 %v601, %v599
      %v630 = vpack.c.b16 %v602, %v600
      %v631 = vpack.c.b16 %v605, %v603
      %v632 = vpack.c.b16 %v606, %v604
      %v633 = vpack.c.b16 %v609, %v607
      %v634 = vpack.c.b16 %v610, %v608
      %v635 = vpack.c.b16 %v613, %v611
      %v636 = vpack.c.b16 %v614, %v612
      %v637 = vpack.c.b16 %v617, %v615
      %v638 = vpack.c.b16 %v618, %v616
      %v639 = vpack.c.b16 %v621, %v619
      %v640 = vpack.c.b16 %v622, %v620
      %v641 = vpack.c.b16 %v625, %v623
      %v642 = vpack.c.b16 %v626, %v624
      %659 = vmatprep.subr.bf16.mxu0 %v628
      %660 = vmatpush1.bf16.msra.mxu0 %v627
      %661 = vmatprep.subr.bf16.mxu0 %v630
      %662 = vmatpush1.bf16.msra.mxu0 %v629
      %663 = vmatprep.subr.bf16.mxu0 %v632
      %664 = vmatpush1.bf16.msra.mxu0 %v631
      %665 = vmatprep.subr.bf16.mxu0 %v634
      %666 = vmatpush1.bf16.msra.mxu0 %v633
      %667 = vmatprep.subr.bf16.mxu0 %v636
      %668 = vmatpush1.bf16.msra.mxu0 %v635
      %669 = vmatprep.subr.bf16.mxu0 %v638
      %670 = vmatpush1.bf16.msra.mxu0 %v637
      %671 = vmatprep.subr.bf16.mxu0 %v640
      %672 = vmatpush1.bf16.msra.mxu0 %v639
      %673 = vmatprep.subr.bf16.mxu0 %v642
      %674 = vmatpush1.bf16.msra.mxu0 %v641
      %675 = vmatprep.subr.bf16.mxu0 0
      %676 = vmatpush1.bf16.msra.mxu0 0
      %677 = vmatprep.subr.bf16.mxu0 0
      %678 = vmatpush1.bf16.msra.mxu0 0
      %679 = vmatprep.subr.bf16.mxu0 0
      %680 = vmatpush1.bf16.msra.mxu0 0
      %681 = vmatprep.subr.bf16.mxu0 0
      %682 = vmatpush1.bf16.msra.mxu0 0
      %683 = vmatprep.subr.bf16.mxu0 0
      %684 = vmatpush1.bf16.msra.mxu0 0
      %685 = vmatprep.subr.bf16.mxu0 0
      %686 = vmatpush1.bf16.msra.mxu0 0
      %687 = vmatprep.subr.bf16.mxu0 0
      %688 = vmatpush1.bf16.msra.mxu0 0
      %689 = vmatprep.subr.bf16.mxu0 0
      %690 = vmatpush1.bf16.msra.mxu0 0
      %691 = vmatprep.mubr.bf16.mxu0 0
      %692 = vmatmul.mubr.bf16.gmra.mrb[0].mxu0 %v553
      %v693 = vpop.f32.mrb[0].mxu0
      %v694 = vadd.f32 %v574, %v693
      %v695 = vpop.f32.mrb[0].mxu0
      %v696 = vadd.f32 %v578, %v695
      %v697 = vpop.f32.mrb[0].mxu0
      %v698 = vadd.f32 %v574, %v697
      %v699 = vpop.f32.mrb[0].mxu0
      %v700 = vadd.f32 %v578, %v699
      %701 = vdwg.mxu0
      %v702 = vxor.u32 %v694, 2147483648
      %v703 = vxor.u32 %v698, 2147483648
      %v704 = vmul.f32 %v702, 1.442695
      %v705 = vpow.pop %v704
      %v706 = vmul.f32 %v703, 1.442695
      %v707 = vpow.pop %v706
      %v708 = vadd.f32 %v705, 1.0
      %v709 = vadd.f32 %v707, 1.0
      %v710 = vrcp.pop %v708
      %v711 = vmul.f32 1.0, %v710
      %v712 = vrcp.pop %v709
      %v713 = vmul.f32 1.0, %v712
      %716 = vrot.lane.b32.xlu0 %v696, 64
      %v717 = vpop.permute.xlu0 %716
      %718 = vrot.lane.b32.xlu0 %v700, 64
      %v719 = vpop.permute.xlu0 %718
      %v722 = vmul.f32 %v711, %v717
      %v723 = vmul.f32 %v713, %v719
      %v724 = vadd.f32 %v696, %v722
      %v725 = vadd.f32 %v700, %v723
      %v726 = vtanh.pop %v724
      %v727 = vtanh.pop %v725
      %v728 = vsub.f32 1.0, %v711
      %v729 = vsub.f32 1.0, %v713
      %732 = vrot.lane.b32.xlu0 %v726, 64
      %v733 = vpop.permute.xlu0 %732
      %734 = vrot.lane.b32.xlu0 %v727, 64
      %v735 = vpop.permute.xlu0 %734
      %v738 = vmul.f32 %v728, %v733
      %v739 = vmul.f32 %v729, %v735
      %742 = vrot.lane.b32.xlu0 %v348, 64
      %v743 = vpop.permute.xlu0 %742
      %744 = vrot.lane.b32.xlu0 %v349, 64
      %v745 = vpop.permute.xlu0 %744
      %v748 = vmul.f32 %v711, %v743
      %v749 = vmul.f32 %v713, %v745
      %v750 = vadd.f32 %v738, %v748
      %v751 = vadd.f32 %v739, %v749
      %754 = vrot.lane.b32.xlu0 %v750, 64
      %v755 = vpop.permute.xlu0 %754
      %756 = vrot.lane.b32.xlu0 %v751, 64
      %v757 = vpop.permute.xlu0 %756
      %760 = vst.msk [vmem:[%s343] sm:$0xff] %vm550, %v755
      %761 = vst.msk [vmem:[%s343 + $0x8] sm:$0xff] %vm550, %v757
      %v762 = vpack.c.bf16 %v751, %v750
      %v763 = vld [vmem:[%s5] sm:$0xf]
      %v764 = vld [vmem:[%s5 + $0x4] sm:$0xf]
      %v765 = vld [vmem:[%s5 + $0x8] sm:$0xf]
      %v766 = vld [vmem:[%s5 + $0xc] sm:$0xf]
      %v767 = vld [vmem:[%s5 + $0x10] sm:$0xf]
      %v768 = vld [vmem:[%s5 + $0x14] sm:$0xf]
      %v769 = vld [vmem:[%s5 + $0x18] sm:$0xf]
      %v770 = vld [vmem:[%s5 + $0x1c] sm:$0xf]
      %v771 = vlaneseq
      %v772 = vshrl.u32 %v771, 7
      %v773 = vsub.s32 3, %v772
      %v774 = vrot.slane %v350, %v773
      %776 = vrot.lane.b32.xlu0 %v762, 64
      %v777 = vpop.permute.xlu0 %776
      %v786 = vunpack.c.l.b16 %v763
      %v787 = vunpack.c.l.b16 %v764
      %v788 = vunpack.c.l.b16 %v765
      %v789 = vunpack.c.l.b16 %v766
      %v790 = vunpack.c.l.b16 %v767
      %v791 = vunpack.c.l.b16 %v768
      %v792 = vunpack.c.l.b16 %v769
      %v793 = vunpack.c.l.b16 %v770
      %v794 = vpack.c.b16 %v787, %v786
      %v795 = vpack.c.b16 %v789, %v788
      %v796 = vpack.c.b16 %v791, %v790
      %v797 = vpack.c.b16 %v793, %v792
      %v803 = vsel %vm550, %v777, 0
      %805 = vmatprep.subr.bf16.mxu0 0
      %806 = vmatpush1.bf16.msra.mxu0 %v794
      %807 = vmatprep.subr.bf16.mxu0 0
      %808 = vmatpush1.bf16.msra.mxu0 %v795
      %809 = vmatprep.subr.bf16.mxu0 0
      %810 = vmatpush1.bf16.msra.mxu0 %v796
      %811 = vmatprep.subr.bf16.mxu0 0
      %812 = vmatpush1.bf16.msra.mxu0 %v797
      %813 = vmatprep.subr.bf16.mxu0 0
      %814 = vmatpush1.bf16.msra.mxu0 0
      %815 = vmatprep.subr.bf16.mxu0 0
      %816 = vmatpush1.bf16.msra.mxu0 0
      %817 = vmatprep.subr.bf16.mxu0 0
      %818 = vmatpush1.bf16.msra.mxu0 0
      %819 = vmatprep.subr.bf16.mxu0 0
      %820 = vmatpush1.bf16.msra.mxu0 0
      %821 = vmatprep.subr.bf16.mxu0 0
      %822 = vmatpush1.bf16.msra.mxu0 0
      %823 = vmatprep.subr.bf16.mxu0 0
      %824 = vmatpush1.bf16.msra.mxu0 0
      %825 = vmatprep.subr.bf16.mxu0 0
      %826 = vmatpush1.bf16.msra.mxu0 0
      %827 = vmatprep.subr.bf16.mxu0 0
      %828 = vmatpush1.bf16.msra.mxu0 0
      %829 = vmatprep.subr.bf16.mxu0 0
      %830 = vmatpush1.bf16.msra.mxu0 0
      %831 = vmatprep.subr.bf16.mxu0 0
      %832 = vmatpush1.bf16.msra.mxu0 0
      %833 = vmatprep.subr.bf16.mxu0 0
      %834 = vmatpush1.bf16.msra.mxu0 0
      %835 = vmatprep.subr.bf16.mxu0 0
      %836 = vmatpush1.bf16.msra.mxu0 0
      %837 = vmatprep.mubr.bf16.mxu0 0
      %838 = vmatmul.mubr.bf16.gmra.mrb[0].mxu0 %v803
      %v839 = vpop.f32.mrb[0].mxu0
      %v840 = vadd.f32 %v774, %v839
      %v841 = vpop.f32.mrb[0].mxu0
      %v842 = vpop.f32.mrb[0].mxu0
      %v843 = vadd.f32 %v774, %v842
      %v844 = vpop.f32.mrb[0].mxu0
      %845 = vdwg.mxu0
      %v846 = vpack.c.bf16 %v843, %v840
      %v848 = vunpack.c.l.b16 %v846
      %v849 = vunpack.c.h.b16 %v846
      %v850 = vpack.c.b16 %v848, %v848
      %v851 = vpack.c.b16 %v849, %v849
      %854 = vst [vmem:[%s337] sm:$0xf] %v850
      %855 = vst [vmem:[%s337 + $0x4] sm:$0xf] %v851
      %s856 = smul.u32 2, %s20
      %p857 = scmp.lt.s32.totalorder %s856, 3
      %s858 = scalar_select %p857, %s856, 3
      %s859 = smul.addr %s858, 4
      %s860 = scalar_lea.vmem %s7, %s859
      %s861 = smul.u32 2, %s20
      %p862 = scmp.lt.s32.totalorder %s861, 3
      %s863 = scalar_select %p862, %s861, 3
      %s864 = smul.addr %s863, 8
      %s865 = scalar_lea.vmem %s8, %s864
      // Predicated region
      $region49: #{actor_gnn_forward.1} parent=47 // pred_check
        %p866 = pneg %p195
      $region50: #{actor_gnn_forward.1} parent=47 // pred_check_branch
        %868 = sbr.rel (%p866) target = $region52
      $region51: #{actor_gnn_forward.1} parent=47 // pred_region
        %s869 = smul.u32 2, %s20
      $region52: #{actor_gnn_forward.1} parent=47 // pred_fallthru
        _
      // Predicated region
      $region53: #{actor_gnn_forward.1} parent=47 // pred_check
        %p870 = pneg %p221
      $region54: #{actor_gnn_forward.1} parent=47 // pred_check_branch
        %872 = sbr.rel (%p870) target = $region56
      $region55: #{actor_gnn_forward.1} parent=47 // pred_region
        %s873 = smul.u32 2, %s20
      $region56: #{actor_gnn_forward.1} parent=47 // pred_fallthru
        _
    $region48: #{actor_gnn_forward.1} parent=5 // pred_fallthru
      _
    %p874 = scmp.le.s32.totalorder 2, %s15
    // Predicated region
    $region57: #{actor_gnn_forward.1} parent=5 // pred_check
      %p875 = pneg %p874
    $region58: #{actor_gnn_forward.1} parent=5 // pred_check_branch
      %877 = sbr.rel (%p875) target = $region60
    $region59: #{actor_gnn_forward.1} parent=5 // pred_region
      %s878 = ssub.s32 %s15, 2
      // Predicated region
      $region61: #{actor_gnn_forward.1} parent=59 // pred_check
        %p879 = pneg %p201
      $region62: #{actor_gnn_forward.1} parent=59 // pred_check_branch
        %881 = sbr.rel (%p879) target = $region64
      $region63: #{actor_gnn_forward.1} parent=59 // pred_region
        %s882 = smul.u32 2, %s21
        %p883 = scmp.lt.s32.totalorder %s882, 3
        %s884 = scalar_select %p883, %s882, 3
        %s885 = smul.addr %s884, 4
        %s886 = scalar_lea.vmem %s7, %s885
      $region64: #{actor_gnn_forward.1} parent=59 // pred_fallthru
        _
      // Predicated region
      $region65: #{actor_gnn_forward.1} parent=59 // pred_check
        %p887 = pneg %p227
      $region66: #{actor_gnn_forward.1} parent=59 // pred_check_branch
        %889 = sbr.rel (%p887) target = $region68
      $region67: #{actor_gnn_forward.1} parent=59 // pred_region
        %s890 = smul.u32 2, %s21
        %p891 = scmp.lt.s32.totalorder %s890, 3
        %s892 = scalar_select %p891, %s890, 3
        %s893 = smul.addr %s892, 8
        %s894 = scalar_lea.vmem %s8, %s893
      $region68: #{actor_gnn_forward.1} parent=59 // pred_fallthru
        _
    $region60: #{actor_gnn_forward.1} parent=5 // pred_fallthru
      _
  $region6: #{actor_gnn_forward.1} parent=0 // loop_footer
    %s19 = sadd.s32 1, %s15
  $region7: #{actor_gnn_forward.1} parent=0 // loop_footer_branch
    %14 = sbr.rel target = $region3
  $region8: #{actor_gnn_forward.1} parent=0 // loop_exit
    _

</llo_original>
